<compile_context>
chip_gen: v7x
topology: tpu7x:2x2x1
jax: 0.10.0
libtpu: 0.0.40
codegen_flags: <defaults>
</compile_context>

<pallas_src>
import jax
import jax.numpy as jnp
from jax.experimental import pallas as pl
from jax.experimental.pallas import tpu as pltpu  # noqa: F401  (TPU-specific extensions)

EPS = 1e-5
H = 4  # hidden width of every layer

# Parameter-slab row layout (each row has H=4 lanes, zero padded to 24 rows):
#   0-1  : W1 (2 x 4)        2 : b1        3 : gamma1    4 : beta1
#   5-8  : W2 (4 x 4)        9 : b2       10 : gamma2   11 : beta2
#   12-15: W3 (4 x 4)       16 : b3       17 : gamma3   18 : beta3
#   19   : W4 as a row (1x4)              20 : b4 in lane 0


def tanh3norm2_kernel(x_ref, p_ref, o_ref):
    x = x_ref[...]                       # (N, 2)
    inv_n = 1.0 / x.shape[0]             # static, folded at trace time

    def linear_h(y, base):
        """y @ W + b with the H weight rows at p[base:base+H], bias row at p[base+H]."""
        z = p_ref[base + H:base + H + 1, :]                 # (1, H) bias, broadcast over N
        for h in range(H):                                  # unrolled VPU FMAs (K = 4)
            z = z + y[:, h:h + 1] * p_ref[base + h:base + h + 1, :]
        return z                                            # (N, H)

    def batchnorm(a, base):
        """Training-mode BatchNorm1d, single-pass stats; gamma=p[base], beta=p[base+1]."""
        s1 = jnp.sum(a, axis=0, keepdims=True)              # independent sublane reduces
        s2 = jnp.sum(a * a, axis=0, keepdims=True)
        mean = s1 * inv_n
        var = s2 * inv_n - mean * mean                      # biased batch variance
        xhat = (a - mean) * jax.lax.rsqrt(var + EPS)        # EUP rsqrt
        return xhat * p_ref[base:base + 1, :] + p_ref[base + 1:base + 2, :]

    # layer 1: Linear(2, 4) as a K=2 broadcast-FMA, then tanh
    z1 = (x[:, 0:1] * p_ref[0:1, :]
          + x[:, 1:2] * p_ref[1:2, :]
          + p_ref[2:3, :])
    p1 = jnp.tanh(z1)
    y1 = batchnorm(p1, 3)

    # layer 2: Linear(4, 4), tanh, BN
    p2 = jnp.tanh(linear_h(y1, 5))
    y2 = batchnorm(p2, 10)

    # layer 3: Linear(4, 4), tanh, BN
    p3 = jnp.tanh(linear_h(y2, 12))
    y3 = batchnorm(p3, 17)

    # layer 4: Linear(4, 1) as a 4-lane reduce + scalar bias
    o_ref[...] = (jnp.sum(y3 * p_ref[19:20, :], axis=-1, keepdims=True)
                  + p_ref[20:21, 0:1])


def pack_params(w1, b1, g1, be1, w2, b2, g2, be2, w3, b3, g3, be3, w4, b4):
    """Pack all parameters into a single (24, H) f32 slab (one DMA, one-time cost)."""
    row = lambda v: jnp.asarray(v, jnp.float32).reshape(1, -1)
    slab = jnp.concatenate([
        w1,                                  # rows 0-1
        row(b1), row(g1), row(be1),          # rows 2, 3, 4
        w2,                                  # rows 5-8
        row(b2), row(g2), row(be2),          # rows 9, 10, 11
        w3,                                  # rows 12-15
        row(b3), row(g3), row(be3),          # rows 16, 17, 18
        w4.reshape(1, -1),                   # row 19 (W4 is (H,1) -> flattened)
        jnp.pad(row(b4), ((0, 0), (0, w1.shape[1] - b4.size))),  # row 20
    ], axis=0).astype(jnp.float32)
    pad = (-slab.shape[0]) % 8               # pad sublanes to a multiple of 8
    return jnp.pad(slab, ((0, pad), (0, 0)))


def tanh_class3_norm2_forward(x, params_slab):
    n = x.shape[0]
    # block_shape == full array dims, so the (8,128) divisibility rule is satisfied.
    full = lambda a: pl.BlockSpec(a.shape, lambda: (0,) * a.ndim)
    return pl.pallas_call(
        tanh3norm2_kernel,
        out_shape=jax.ShapeDtypeStruct((n, 1), jnp.float32),
        in_specs=[full(x), full(params_slab)],
        out_specs=pl.BlockSpec((n, 1), lambda: (0, 0)),
    )(x, params_slab)


if __name__ == "__main__":
    key = jax.random.PRNGKey(0)
    N, IN_F, HID, OUT_F = 8, 2, 4, 1
    keys = jax.random.split(key, 15)

    def lin(kw, kb, fan_in, fan_out):
        # PyTorch nn.Linear init: U(-1/sqrt(fan_in), 1/sqrt(fan_in)); W stored as (in, out).
        bound = fan_in ** -0.5
        w = jax.random.uniform(kw, (fan_in, fan_out), jnp.float32, -bound, bound)
        b = jax.random.uniform(kb, (fan_out,), jnp.float32, -bound, bound)
        return w, b

    w1, b1 = lin(keys[1], keys[2], IN_F, HID)
    w2, b2 = lin(keys[3], keys[4], HID, HID)
    w3, b3 = lin(keys[5], keys[6], HID, HID)
    w4, b4 = lin(keys[7], keys[8], HID, OUT_F)
    # BatchNorm affine params (non-trivial values so the check exercises gamma/beta)
    g1 = jax.random.uniform(keys[9], (HID,), jnp.float32, 0.5, 1.5)
    g2 = jax.random.uniform(keys[10], (HID,), jnp.float32, 0.5, 1.5)
    g3 = jax.random.uniform(keys[11], (HID,), jnp.float32, 0.5, 1.5)
    be1 = jax.random.uniform(keys[12], (HID,), jnp.float32, -0.5, 0.5)
    be2 = jax.random.uniform(keys[13], (HID,), jnp.float32, -0.5, 0.5)
    be3 = jax.random.uniform(keys[14], (HID,), jnp.float32, -0.5, 0.5)

    x = jax.random.normal(keys[0], (N, IN_F), dtype=jnp.float32)
    params = pack_params(w1, b1, g1, be1, w2, b2, g2, be2, w3, b3, g3, be3, w4, b4)

    out = tanh_class3_norm2_forward(x, params)
    jax.block_until_ready(out)

    # pure-JAX reference of the same forward pass (training-mode BN)
    def bn_ref(a, g, b):
        m = a.mean(0, keepdims=True)
        v = ((a - m) ** 2).mean(0, keepdims=True)
        return (a - m) / jnp.sqrt(v + EPS) * g + b

    p1 = jnp.tanh(x @ w1 + b1)
    p2 = jnp.tanh(bn_ref(p1, g1, be1) @ w2 + b2)
    p3 = jnp.tanh(bn_ref(p2, g2, be2) @ w3 + b3)
    ref = bn_ref(p3, g3, be3) @ w4 + b4

    assert out.shape == (N, OUT_F)
    assert jnp.allclose(out, ref, atol=1e-4, rtol=1e-4), (out, ref)

    print("KERNEL_OK")
</pallas_src>

<mosaic_0001>
module attributes {stable_mosaic.version = 11 : i64} {
  func.func @tanh3norm2_kernel(%arg0: memref<8x2xf32, #tpu.memory_space<vmem>>, %arg1: memref<24x4xf32, #tpu.memory_space<vmem>>, %arg2: memref<8x1xf32, #tpu.memory_space<vmem>>) attributes {dimension_semantics = [], scalar_prefetch = 0 : i64, scratch_operands = 0 : i64, tpu.core_type = #tpu.core_type<tc>} {
    %c0 = arith.constant 0 : index
    %c0_0 = arith.constant 0 : index
    %0 = vector.load %arg0[%c0, %c0_0] : memref<8x2xf32, #tpu.memory_space<vmem>>, vector<8x2xf32>
    %1 = vector.extract_strided_slice %0 {offsets = [0, 0], sizes = [8, 1], strides = [1, 1]} : vector<8x2xf32> to vector<8x1xf32>
    %c0_1 = arith.constant 0 : index
    %c0_2 = arith.constant 0 : index
    %2 = vector.load %arg1[%c0_1, %c0_2] : memref<24x4xf32, #tpu.memory_space<vmem>>, vector<1x4xf32>
    %3 = vector.broadcast %1 : vector<8x1xf32> to vector<8x4xf32>
    %4 = vector.broadcast %2 : vector<1x4xf32> to vector<8x4xf32>
    %5 = arith.mulf %3, %4 : vector<8x4xf32>
    %6 = vector.extract_strided_slice %0 {offsets = [0, 1], sizes = [8, 1], strides = [1, 1]} : vector<8x2xf32> to vector<8x1xf32>
    %c1 = arith.constant 1 : index
    %c0_3 = arith.constant 0 : index
    %7 = vector.load %arg1[%c1, %c0_3] : memref<24x4xf32, #tpu.memory_space<vmem>>, vector<1x4xf32>
    %8 = vector.broadcast %6 : vector<8x1xf32> to vector<8x4xf32>
    %9 = vector.broadcast %7 : vector<1x4xf32> to vector<8x4xf32>
    %10 = arith.mulf %8, %9 : vector<8x4xf32>
    %11 = arith.addf %5, %10 : vector<8x4xf32>
    %c2 = arith.constant 2 : index
    %c0_4 = arith.constant 0 : index
    %12 = vector.load %arg1[%c2, %c0_4] : memref<24x4xf32, #tpu.memory_space<vmem>>, vector<1x4xf32>
    %13 = vector.broadcast %12 : vector<1x4xf32> to vector<8x4xf32>
    %14 = arith.addf %11, %13 : vector<8x4xf32>
    %15 = math.tanh %14 : vector<8x4xf32>
    %cst = arith.constant dense<0.000000e+00> : vector<4xf32>
    %16 = vector.multi_reduction <add>, %15, %cst [0] : vector<8x4xf32> to vector<4xf32>
    %17 = vector.shape_cast %16 : vector<4xf32> to vector<1x4xf32>
    %18 = arith.mulf %15, %15 : vector<8x4xf32>
    %cst_5 = arith.constant dense<0.000000e+00> : vector<4xf32>
    %19 = vector.multi_reduction <add>, %18, %cst_5 [0] : vector<8x4xf32> to vector<4xf32>
    %20 = vector.shape_cast %19 : vector<4xf32> to vector<1x4xf32>
    %cst_6 = arith.constant 1.250000e-01 : f32
    %21 = vector.broadcast %cst_6 : f32 to vector<1x4xf32>
    %22 = arith.mulf %17, %21 : vector<1x4xf32>
    %cst_7 = arith.constant 1.250000e-01 : f32
    %23 = vector.broadcast %cst_7 : f32 to vector<1x4xf32>
    %24 = arith.mulf %20, %23 : vector<1x4xf32>
    %25 = arith.mulf %22, %22 : vector<1x4xf32>
    %26 = arith.subf %24, %25 : vector<1x4xf32>
    %27 = vector.broadcast %22 : vector<1x4xf32> to vector<8x4xf32>
    %28 = arith.subf %15, %27 : vector<8x4xf32>
    %cst_8 = arith.constant 9.99999974E-6 : f32
    %29 = vector.broadcast %cst_8 : f32 to vector<1x4xf32>
    %30 = arith.addf %26, %29 : vector<1x4xf32>
    %31 = math.rsqrt %30 : vector<1x4xf32>
    %32 = vector.broadcast %31 : vector<1x4xf32> to vector<8x4xf32>
    %33 = arith.mulf %28, %32 : vector<8x4xf32>
    %c3 = arith.constant 3 : index
    %c0_9 = arith.constant 0 : index
    %34 = vector.load %arg1[%c3, %c0_9] : memref<24x4xf32, #tpu.memory_space<vmem>>, vector<1x4xf32>
    %35 = vector.broadcast %34 : vector<1x4xf32> to vector<8x4xf32>
    %36 = arith.mulf %33, %35 : vector<8x4xf32>
    %c4 = arith.constant 4 : index
    %c0_10 = arith.constant 0 : index
    %37 = vector.load %arg1[%c4, %c0_10] : memref<24x4xf32, #tpu.memory_space<vmem>>, vector<1x4xf32>
    %38 = vector.broadcast %37 : vector<1x4xf32> to vector<8x4xf32>
    %39 = arith.addf %36, %38 : vector<8x4xf32>
    %c9 = arith.constant 9 : index
    %c0_11 = arith.constant 0 : index
    %40 = vector.load %arg1[%c9, %c0_11] : memref<24x4xf32, #tpu.memory_space<vmem>>, vector<1x4xf32>
    %41 = vector.extract_strided_slice %39 {offsets = [0, 0], sizes = [8, 1], strides = [1, 1]} : vector<8x4xf32> to vector<8x1xf32>
    %c5 = arith.constant 5 : index
    %c0_12 = arith.constant 0 : index
    %42 = vector.load %arg1[%c5, %c0_12] : memref<24x4xf32, #tpu.memory_space<vmem>>, vector<1x4xf32>
    %43 = vector.broadcast %41 : vector<8x1xf32> to vector<8x4xf32>
    %44 = vector.broadcast %42 : vector<1x4xf32> to vector<8x4xf32>
    %45 = arith.mulf %43, %44 : vector<8x4xf32>
    %46 = vector.broadcast %40 : vector<1x4xf32> to vector<8x4xf32>
    %47 = arith.addf %46, %45 : vector<8x4xf32>
    %48 = vector.extract_strided_slice %39 {offsets = [0, 1], sizes = [8, 1], strides = [1, 1]} : vector<8x4xf32> to vector<8x1xf32>
    %c6 = arith.constant 6 : index
    %c0_13 = arith.constant 0 : index
    %49 = vector.load %arg1[%c6, %c0_13] : memref<24x4xf32, #tpu.memory_space<vmem>>, vector<1x4xf32>
    %50 = vector.broadcast %48 : vector<8x1xf32> to vector<8x4xf32>
    %51 = vector.broadcast %49 : vector<1x4xf32> to vector<8x4xf32>
    %52 = arith.mulf %50, %51 : vector<8x4xf32>
    %53 = arith.addf %47, %52 : vector<8x4xf32>
    %54 = vector.extract_strided_slice %39 {offsets = [0, 2], sizes = [8, 1], strides = [1, 1]} : vector<8x4xf32> to vector<8x1xf32>
    %c7 = arith.constant 7 : index
    %c0_14 = arith.constant 0 : index
    %55 = vector.load %arg1[%c7, %c0_14] : memref<24x4xf32, #tpu.memory_space<vmem>>, vector<1x4xf32>
    %56 = vector.broadcast %54 : vector<8x1xf32> to vector<8x4xf32>
    %57 = vector.broadcast %55 : vector<1x4xf32> to vector<8x4xf32>
    %58 = arith.mulf %56, %57 : vector<8x4xf32>
    %59 = arith.addf %53, %58 : vector<8x4xf32>
    %60 = vector.extract_strided_slice %39 {offsets = [0, 3], sizes = [8, 1], strides = [1, 1]} : vector<8x4xf32> to vector<8x1xf32>
    %c8 = arith.constant 8 : index
    %c0_15 = arith.constant 0 : index
    %61 = vector.load %arg1[%c8, %c0_15] : memref<24x4xf32, #tpu.memory_space<vmem>>, vector<1x4xf32>
    %62 = vector.broadcast %60 : vector<8x1xf32> to vector<8x4xf32>
    %63 = vector.broadcast %61 : vector<1x4xf32> to vector<8x4xf32>
    %64 = arith.mulf %62, %63 : vector<8x4xf32>
    %65 = arith.addf %59, %64 : vector<8x4xf32>
    %66 = math.tanh %65 : vector<8x4xf32>
    %cst_16 = arith.constant dense<0.000000e+00> : vector<4xf32>
    %67 = vector.multi_reduction <add>, %66, %cst_16 [0] : vector<8x4xf32> to vector<4xf32>
    %68 = vector.shape_cast %67 : vector<4xf32> to vector<1x4xf32>
    %69 = arith.mulf %66, %66 : vector<8x4xf32>
    %cst_17 = arith.constant dense<0.000000e+00> : vector<4xf32>
    %70 = vector.multi_reduction <add>, %69, %cst_17 [0] : vector<8x4xf32> to vector<4xf32>
    %71 = vector.shape_cast %70 : vector<4xf32> to vector<1x4xf32>
    %cst_18 = arith.constant 1.250000e-01 : f32
    %72 = vector.broadcast %cst_18 : f32 to vector<1x4xf32>
    %73 = arith.mulf %68, %72 : vector<1x4xf32>
    %cst_19 = arith.constant 1.250000e-01 : f32
    %74 = vector.broadcast %cst_19 : f32 to vector<1x4xf32>
    %75 = arith.mulf %71, %74 : vector<1x4xf32>
    %76 = arith.mulf %73, %73 : vector<1x4xf32>
    %77 = arith.subf %75, %76 : vector<1x4xf32>
    %78 = vector.broadcast %73 : vector<1x4xf32> to vector<8x4xf32>
    %79 = arith.subf %66, %78 : vector<8x4xf32>
    %cst_20 = arith.constant 9.99999974E-6 : f32
    %80 = vector.broadcast %cst_20 : f32 to vector<1x4xf32>
    %81 = arith.addf %77, %80 : vector<1x4xf32>
    %82 = math.rsqrt %81 : vector<1x4xf32>
    %83 = vector.broadcast %82 : vector<1x4xf32> to vector<8x4xf32>
    %84 = arith.mulf %79, %83 : vector<8x4xf32>
    %c10 = arith.constant 10 : index
    %c0_21 = arith.constant 0 : index
    %85 = vector.load %arg1[%c10, %c0_21] : memref<24x4xf32, #tpu.memory_space<vmem>>, vector<1x4xf32>
    %86 = vector.broadcast %85 : vector<1x4xf32> to vector<8x4xf32>
    %87 = arith.mulf %84, %86 : vector<8x4xf32>
    %c11 = arith.constant 11 : index
    %c0_22 = arith.constant 0 : index
    %88 = vector.load %arg1[%c11, %c0_22] : memref<24x4xf32, #tpu.memory_space<vmem>>, vector<1x4xf32>
    %89 = vector.broadcast %88 : vector<1x4xf32> to vector<8x4xf32>
    %90 = arith.addf %87, %89 : vector<8x4xf32>
    %c16 = arith.constant 16 : index
    %c0_23 = arith.constant 0 : index
    %91 = vector.load %arg1[%c16, %c0_23] : memref<24x4xf32, #tpu.memory_space<vmem>>, vector<1x4xf32>
    %92 = vector.extract_strided_slice %90 {offsets = [0, 0], sizes = [8, 1], strides = [1, 1]} : vector<8x4xf32> to vector<8x1xf32>
    %c12 = arith.constant 12 : index
    %c0_24 = arith.constant 0 : index
    %93 = vector.load %arg1[%c12, %c0_24] : memref<24x4xf32, #tpu.memory_space<vmem>>, vector<1x4xf32>
    %94 = vector.broadcast %92 : vector<8x1xf32> to vector<8x4xf32>
    %95 = vector.broadcast %93 : vector<1x4xf32> to vector<8x4xf32>
    %96 = arith.mulf %94, %95 : vector<8x4xf32>
    %97 = vector.broadcast %91 : vector<1x4xf32> to vector<8x4xf32>
    %98 = arith.addf %97, %96 : vector<8x4xf32>
    %99 = vector.extract_strided_slice %90 {offsets = [0, 1], sizes = [8, 1], strides = [1, 1]} : vector<8x4xf32> to vector<8x1xf32>
    %c13 = arith.constant 13 : index
    %c0_25 = arith.constant 0 : index
    %100 = vector.load %arg1[%c13, %c0_25] : memref<24x4xf32, #tpu.memory_space<vmem>>, vector<1x4xf32>
    %101 = vector.broadcast %99 : vector<8x1xf32> to vector<8x4xf32>
    %102 = vector.broadcast %100 : vector<1x4xf32> to vector<8x4xf32>
    %103 = arith.mulf %101, %102 : vector<8x4xf32>
    %104 = arith.addf %98, %103 : vector<8x4xf32>
    %105 = vector.extract_strided_slice %90 {offsets = [0, 2], sizes = [8, 1], strides = [1, 1]} : vector<8x4xf32> to vector<8x1xf32>
    %c14 = arith.constant 14 : index
    %c0_26 = arith.constant 0 : index
    %106 = vector.load %arg1[%c14, %c0_26] : memref<24x4xf32, #tpu.memory_space<vmem>>, vector<1x4xf32>
    %107 = vector.broadcast %105 : vector<8x1xf32> to vector<8x4xf32>
    %108 = vector.broadcast %106 : vector<1x4xf32> to vector<8x4xf32>
    %109 = arith.mulf %107, %108 : vector<8x4xf32>
    %110 = arith.addf %104, %109 : vector<8x4xf32>
    %111 = vector.extract_strided_slice %90 {offsets = [0, 3], sizes = [8, 1], strides = [1, 1]} : vector<8x4xf32> to vector<8x1xf32>
    %c15 = arith.constant 15 : index
    %c0_27 = arith.constant 0 : index
    %112 = vector.load %arg1[%c15, %c0_27] : memref<24x4xf32, #tpu.memory_space<vmem>>, vector<1x4xf32>
    %113 = vector.broadcast %111 : vector<8x1xf32> to vector<8x4xf32>
    %114 = vector.broadcast %112 : vector<1x4xf32> to vector<8x4xf32>
    %115 = arith.mulf %113, %114 : vector<8x4xf32>
    %116 = arith.addf %110, %115 : vector<8x4xf32>
    %117 = math.tanh %116 : vector<8x4xf32>
    %cst_28 = arith.constant dense<0.000000e+00> : vector<4xf32>
    %118 = vector.multi_reduction <add>, %117, %cst_28 [0] : vector<8x4xf32> to vector<4xf32>
    %119 = vector.shape_cast %118 : vector<4xf32> to vector<1x4xf32>
    %120 = arith.mulf %117, %117 : vector<8x4xf32>
    %cst_29 = arith.constant dense<0.000000e+00> : vector<4xf32>
    %121 = vector.multi_reduction <add>, %120, %cst_29 [0] : vector<8x4xf32> to vector<4xf32>
    %122 = vector.shape_cast %121 : vector<4xf32> to vector<1x4xf32>
    %cst_30 = arith.constant 1.250000e-01 : f32
    %123 = vector.broadcast %cst_30 : f32 to vector<1x4xf32>
    %124 = arith.mulf %119, %123 : vector<1x4xf32>
    %cst_31 = arith.constant 1.250000e-01 : f32
    %125 = vector.broadcast %cst_31 : f32 to vector<1x4xf32>
    %126 = arith.mulf %122, %125 : vector<1x4xf32>
    %127 = arith.mulf %124, %124 : vector<1x4xf32>
    %128 = arith.subf %126, %127 : vector<1x4xf32>
    %129 = vector.broadcast %124 : vector<1x4xf32> to vector<8x4xf32>
    %130 = arith.subf %117, %129 : vector<8x4xf32>
    %cst_32 = arith.constant 9.99999974E-6 : f32
    %131 = vector.broadcast %cst_32 : f32 to vector<1x4xf32>
    %132 = arith.addf %128, %131 : vector<1x4xf32>
    %133 = math.rsqrt %132 : vector<1x4xf32>
    %134 = vector.broadcast %133 : vector<1x4xf32> to vector<8x4xf32>
    %135 = arith.mulf %130, %134 : vector<8x4xf32>
    %c17 = arith.constant 17 : index
    %c0_33 = arith.constant 0 : index
    %136 = vector.load %arg1[%c17, %c0_33] : memref<24x4xf32, #tpu.memory_space<vmem>>, vector<1x4xf32>
    %137 = vector.broadcast %136 : vector<1x4xf32> to vector<8x4xf32>
    %138 = arith.mulf %135, %137 : vector<8x4xf32>
    %c18 = arith.constant 18 : index
    %c0_34 = arith.constant 0 : index
    %139 = vector.load %arg1[%c18, %c0_34] : memref<24x4xf32, #tpu.memory_space<vmem>>, vector<1x4xf32>
    %140 = vector.broadcast %139 : vector<1x4xf32> to vector<8x4xf32>
    %141 = arith.addf %138, %140 : vector<8x4xf32>
    %c19 = arith.constant 19 : index
    %c0_35 = arith.constant 0 : index
    %142 = vector.load %arg1[%c19, %c0_35] : memref<24x4xf32, #tpu.memory_space<vmem>>, vector<1x4xf32>
    %143 = vector.broadcast %142 : vector<1x4xf32> to vector<8x4xf32>
    %144 = arith.mulf %141, %143 : vector<8x4xf32>
    %cst_36 = arith.constant dense<0.000000e+00> : vector<8xf32>
    %145 = vector.multi_reduction <add>, %144, %cst_36 [1] : vector<8x4xf32> to vector<8xf32>
    %146 = vector.shape_cast %145 : vector<8xf32> to vector<8x1xf32>
    %c20 = arith.constant 20 : index
    %c0_37 = arith.constant 0 : index
    %147 = vector.load %arg1[%c20, %c0_37] : memref<24x4xf32, #tpu.memory_space<vmem>>, vector<1x1xf32>
    %148 = vector.broadcast %147 : vector<1x1xf32> to vector<8x1xf32>
    %149 = arith.addf %146, %148 : vector<8x1xf32>
    %c0_38 = arith.constant 0 : index
    %c0_39 = arith.constant 0 : index
    %150 = vector.load %arg2[%c0_38, %c0_39] : memref<8x1xf32, #tpu.memory_space<vmem>>, vector<8x1xf32>
    tpu.vector_store %arg2[%c0_38, %c0_39], %149 {strides = array<i32>} : memref<8x1xf32, #tpu.memory_space<vmem>>, vector<8x1xf32>,
    return
  }
}

</mosaic_0001>

<llo_original>
// kernel: tpu_custom_call.1
$region0: #{tpu_custom_call.1}
  #allocation0 [shape = 'u32[]', space=smem, size = 0x4, offset = 0x4, fixed_abs, tag = 'smem constant byte address 0x4 - core index']
  #allocation1 [shape = 'u32[144,128]{1,0:T(1,128)}', space=vmem, size = 0x12000, scoped, tag = 'internal scratch']
  %s0 = inlined_call_operand.vmem [shape: f32[8,2], index: 0, kind: input, shape index: {}]
  %s1 = inlined_call_operand.vmem [shape: f32[24,4], index: 1, kind: input, shape index: {}]
  %s2 = inlined_call_operand.vmem [shape: f32[8,1], index: 2, kind: output, shape index: {}]
  %s3 = sld [smem:[#allocation0]]
  $region18: #{tpu_custom_call.1} parent=0
    _
  %s5 = ssub.s32 1, %s3
  %s6 = scalar_select 0, %s5, %s3
  // Predicated region
  $region2: #{tpu_custom_call.1} parent=0 // pred_check
    _
  $region3: #{tpu_custom_call.1} parent=0 // pred_check_branch
    %8 = sbr.rel (0) target = $region5
  $region4: #{tpu_custom_call.1} parent=0 // pred_region
    _
  $region5: #{tpu_custom_call.1} parent=0 // pred_fallthru
    _
  // Predicated region
  $region6: #{tpu_custom_call.1} parent=0 // pred_check
    _
  $region7: #{tpu_custom_call.1} parent=0 // pred_check_branch
    %10 = sbr.rel (0) target = $region9
  $region8: #{tpu_custom_call.1} parent=0 // pred_region
    _
  $region9: #{tpu_custom_call.1} parent=0 // pred_fallthru
    _
  %v11 = vld [vmem:[%s0] sm:$0xff]
  %v12 = vld [vmem:[%s1] sm:$0x1]
  %14 = vset.pattern.permute.xlu0 0
  %15 = vperm.xlu0 %14, %v11
  %v16 = vpop.permute.xlu0 %15
  %v18 = vlaneseq
  %v19 = vshrl.u32 %v18, 7
  %v20 = vsub.s32 0, %v19
  %v21 = vrot.slane %v12, %v20
  %v22 = vmul.f32 %v16, %v21
  %v23 = vld [vmem:[%s1 + $0x1] sm:$0x1]
  %24 = vset.pattern.permute.xlu0 1
  %25 = vperm.xlu0 %24, %v11
  %v26 = vpop.permute.xlu0 %25
  %v28 = vlaneseq
  %v29 = vshrl.u32 %v28, 7
  %v30 = vsub.s32 0, %v29
  %v31 = vrot.slane %v23, %v30
  %v32 = vmul.f32 %v26, %v31
  %v33 = vadd.f32 %v22, %v32
  %v34 = vld [vmem:[%s1 + $0x2] sm:$0x1]
  %v35 = vlaneseq
  %v36 = vshrl.u32 %v35, 7
  %v37 = vsub.s32 0, %v36
  %v38 = vrot.slane %v34, %v37
  %v39 = vadd.f32 %v33, %v38
  %v40 = vtanh.pop %v39
  %vm41 = vcmask 31744
  %v42 = vsel %vm41, %v40, 0.0
  %v43 = vrot.slane %v42, 4
  %v44 = vadd.f32 %v42, %v43
  %v45 = vrot.slane %v44, 2
  %v46 = vadd.f32 %v44, %v45
  %v47 = vrot.slane %v46, 1
  %v48 = vadd.f32 %v46, %v47
  %v49 = vmul.f32 %v40, %v40
  %v50 = vsel %vm41, %v49, 0.0
  %v51 = vrot.slane %v50, 4
  %v52 = vadd.f32 %v50, %v51
  %v53 = vrot.slane %v52, 2
  %v54 = vadd.f32 %v52, %v53
  %v55 = vrot.slane %v54, 1
  %v56 = vadd.f32 %v54, %v55
  %v57 = vmul.f32 %v48, 0.125
  %v58 = vmul.f32 %v56, 0.125
  %v59 = vmul.f32 %v57, %v57
  %v60 = vsub.f32 %v58, %v59
  %v61 = vsub.f32 %v40, %v57
  %v62 = vadd.f32 %v60, 1e-05
  %v63 = vrsqrt.pop %v62
  %v64 = vmul.f32 %v61, %v63
  %v65 = vld [vmem:[%s1 + $0x3] sm:$0x1]
  %v66 = vlaneseq
  %v67 = vshrl.u32 %v66, 7
  %v68 = vsub.s32 0, %v67
  %v69 = vrot.slane %v65, %v68
  %v70 = vmul.f32 %v64, %v69
  %v71 = vld [vmem:[%s1 + $0x4] sm:$0x1]
  %v72 = vlaneseq
  %v73 = vshrl.u32 %v72, 7
  %v74 = vsub.s32 0, %v73
  %v75 = vrot.slane %v71, %v74
  %v76 = vadd.f32 %v70, %v75
  %v77 = vld [vmem:[%s1 + $0x9] sm:$0x1]
  %v78 = vld [vmem:[%s1 + $0x5] sm:$0x1]
  %80 = vset.pattern.permute.xlu0 0
  %81 = vperm.xlu0 %80, %v76
  %v82 = vpop.permute.xlu0 %81
  %v84 = vlaneseq
  %v85 = vshrl.u32 %v84, 7
  %v86 = vsub.s32 0, %v85
  %v87 = vrot.slane %v78, %v86
  %v88 = vmul.f32 %v82, %v87
  %v89 = vlaneseq
  %v90 = vshrl.u32 %v89, 7
  %v91 = vsub.s32 0, %v90
  %v92 = vrot.slane %v77, %v91
  %v93 = vadd.f32 %v92, %v88
  %v94 = vld [vmem:[%s1 + $0x6] sm:$0x1]
  %95 = vset.pattern.permute.xlu0 1
  %96 = vperm.xlu0 %95, %v76
  %v97 = vpop.permute.xlu0 %96
  %v99 = vlaneseq
  %v100 = vshrl.u32 %v99, 7
  %v101 = vsub.s32 0, %v100
  %v102 = vrot.slane %v94, %v101
  %v103 = vmul.f32 %v97, %v102
  %v104 = vadd.f32 %v93, %v103
  %v105 = vld [vmem:[%s1 + $0x7] sm:$0x1]
  %106 = vset.pattern.permute.xlu0 2
  %107 = vperm.xlu0 %106, %v76
  %v108 = vpop.permute.xlu0 %107
  %v110 = vlaneseq
  %v111 = vshrl.u32 %v110, 7
  %v112 = vsub.s32 0, %v111
  %v113 = vrot.slane %v105, %v112
  %v114 = vmul.f32 %v108, %v113
  %v115 = vadd.f32 %v104, %v114
  %v116 = vld [vmem:[%s1 + $0x8] sm:$0x1]
  %117 = vset.pattern.permute.xlu0 3
  %118 = vperm.xlu0 %117, %v76
  %v119 = vpop.permute.xlu0 %118
  %v121 = vlaneseq
  %v122 = vshrl.u32 %v121, 7
  %v123 = vsub.s32 0, %v122
  %v124 = vrot.slane %v116, %v123
  %v125 = vmul.f32 %v119, %v124
  %v126 = vadd.f32 %v115, %v125
  %v127 = vtanh.pop %v126
  %v128 = vsel %vm41, %v127, 0.0
  %v129 = vrot.slane %v128, 4
  %v130 = vadd.f32 %v128, %v129
  %v131 = vrot.slane %v130, 2
  %v132 = vadd.f32 %v130, %v131
  %v133 = vrot.slane %v132, 1
  %v134 = vadd.f32 %v132, %v133
  %v135 = vmul.f32 %v127, %v127
  %v136 = vsel %vm41, %v135, 0.0
  %v137 = vrot.slane %v136, 4
  %v138 = vadd.f32 %v136, %v137
  %v139 = vrot.slane %v138, 2
  %v140 = vadd.f32 %v138, %v139
  %v141 = vrot.slane %v140, 1
  %v142 = vadd.f32 %v140, %v141
  %v143 = vmul.f32 %v134, 0.125
  %v144 = vmul.f32 %v142, 0.125
  %v145 = vmul.f32 %v143, %v143
  %v146 = vsub.f32 %v144, %v145
  %v147 = vsub.f32 %v127, %v143
  %v148 = vadd.f32 %v146, 1e-05
  %v149 = vrsqrt.pop %v148
  %v150 = vmul.f32 %v147, %v149
  %v151 = vld [vmem:[%s1 + $0xa] sm:$0x1]
  %v152 = vlaneseq
  %v153 = vshrl.u32 %v152, 7
  %v154 = vsub.s32 0, %v153
  %v155 = vrot.slane %v151, %v154
  %v156 = vmul.f32 %v150, %v155
  %v157 = vld [vmem:[%s1 + $0xb] sm:$0x1]
  %v158 = vlaneseq
  %v159 = vshrl.u32 %v158, 7
  %v160 = vsub.s32 0, %v159
  %v161 = vrot.slane %v157, %v160
  %v162 = vadd.f32 %v156, %v161
  %v163 = vld [vmem:[%s1 + $0x10] sm:$0x1]
  %v164 = vld [vmem:[%s1 + $0xc] sm:$0x1]
  %166 = vset.pattern.permute.xlu0 0
  %167 = vperm.xlu0 %166, %v162
  %v168 = vpop.permute.xlu0 %167
  %v170 = vlaneseq
  %v171 = vshrl.u32 %v170, 7
  %v172 = vsub.s32 0, %v171
  %v173 = vrot.slane %v164, %v172
  %v174 = vmul.f32 %v168, %v173
  %v175 = vlaneseq
  %v176 = vshrl.u32 %v175, 7
  %v177 = vsub.s32 0, %v176
  %v178 = vrot.slane %v163, %v177
  %v179 = vadd.f32 %v178, %v174
  %v180 = vld [vmem:[%s1 + $0xd] sm:$0x1]
  %181 = vset.pattern.permute.xlu0 1
  %182 = vperm.xlu0 %181, %v162
  %v183 = vpop.permute.xlu0 %182
  %v185 = vlaneseq
  %v186 = vshrl.u32 %v185, 7
  %v187 = vsub.s32 0, %v186
  %v188 = vrot.slane %v180, %v187
  %v189 = vmul.f32 %v183, %v188
  %v190 = vadd.f32 %v179, %v189
  %v191 = vld [vmem:[%s1 + $0xe] sm:$0x1]
  %192 = vset.pattern.permute.xlu0 2
  %193 = vperm.xlu0 %192, %v162
  %v194 = vpop.permute.xlu0 %193
  %v196 = vlaneseq
  %v197 = vshrl.u32 %v196, 7
  %v198 = vsub.s32 0, %v197
  %v199 = vrot.slane %v191, %v198
  %v200 = vmul.f32 %v194, %v199
  %v201 = vadd.f32 %v190, %v200
  %v202 = vld [vmem:[%s1 + $0xf] sm:$0x1]
  %203 = vset.pattern.permute.xlu0 3
  %204 = vperm.xlu0 %203, %v162
  %v205 = vpop.permute.xlu0 %204
  %v207 = vlaneseq
  %v208 = vshrl.u32 %v207, 7
  %v209 = vsub.s32 0, %v208
  %v210 = vrot.slane %v202, %v209
  %v211 = vmul.f32 %v205, %v210
  %v212 = vadd.f32 %v201, %v211
  %v213 = vtanh.pop %v212
  %v214 = vsel %vm41, %v213, 0.0
  %v215 = vrot.slane %v214, 4
  %v216 = vadd.f32 %v214, %v215
  %v217 = vrot.slane %v216, 2
  %v218 = vadd.f32 %v216, %v217
  %v219 = vrot.slane %v218, 1
  %v220 = vadd.f32 %v218, %v219
  %v221 = vmul.f32 %v213, %v213
  %v222 = vsel %vm41, %v221, 0.0
  %v223 = vrot.slane %v222, 4
  %v224 = vadd.f32 %v222, %v223
  %v225 = vrot.slane %v224, 2
  %v226 = vadd.f32 %v224, %v225
  %v227 = vrot.slane %v226, 1
  %v228 = vadd.f32 %v226, %v227
  %v229 = vmul.f32 %v220, 0.125
  %v230 = vmul.f32 %v228, 0.125
  %v231 = vmul.f32 %v229, %v229
  %v232 = vsub.f32 %v230, %v231
  %v233 = vsub.f32 %v213, %v229
  %v234 = vadd.f32 %v232, 1e-05
  %v235 = vrsqrt.pop %v234
  %v236 = vmul.f32 %v233, %v235
  %v237 = vld [vmem:[%s1 + $0x11] sm:$0x1]
  %v238 = vlaneseq
  %v239 = vshrl.u32 %v238, 7
  %v240 = vsub.s32 0, %v239
  %v241 = vrot.slane %v237, %v240
  %v242 = vmul.f32 %v236, %v241
  %v243 = vld [vmem:[%s1 + $0x12] sm:$0x1]
  %v244 = vlaneseq
  %v245 = vshrl.u32 %v244, 7
  %v246 = vsub.s32 0, %v245
  %v247 = vrot.slane %v243, %v246
  %v248 = vadd.f32 %v242, %v247
  %v249 = vld [vmem:[%s1 + $0x13] sm:$0x1]
  %v250 = vlaneseq
  %v251 = vshrl.u32 %v250, 7
  %v252 = vsub.s32 0, %v251
  %v253 = vrot.slane %v249, %v252
  %v254 = vmul.f32 %v248, %v253
  %v255 = vsel %vm41, %v254, 0.0
  %256 = vadd.xlane.f32.xlu0 %v255
  %v257 = vpop.xlane.xlu0 %256
  %v258 = vld [vmem:[%s1 + $0x14] sm:$0x1]
  %v259 = vlaneseq
  %v260 = vshrl.u32 %v259, 7
  %v261 = vsub.s32 0, %v260
  %v262 = vrot.slane %v258, %v261
  %v263 = vadd.f32 %v257, %v262
  %vm264 = vcmask 7168
  %265 = vst.msk [vmem:[%s2] sm:$0xff] %vm264, %v263
  // Predicated region
  $region10: #{tpu_custom_call.1} parent=0 // pred_check
    _
  $region11: #{tpu_custom_call.1} parent=0 // pred_check_branch
    %267 = sbr.rel (0) target = $region13
  $region12: #{tpu_custom_call.1} parent=0 // pred_region
    _
  $region13: #{tpu_custom_call.1} parent=0 // pred_fallthru
    _
  // Predicated region
  $region14: #{tpu_custom_call.1} parent=0 // pred_check
    _
  $region15: #{tpu_custom_call.1} parent=0 // pred_check_branch
    %269 = sbr.rel (0) target = $region17
  $region16: #{tpu_custom_call.1} parent=0 // pred_region
    _
  $region17: #{tpu_custom_call.1} parent=0 // pred_fallthru
    _

</llo_original>
